<compile_context>
chip_gen: v6e
topology: v6e:2x2x1
jax: 0.10.0
libtpu: 0.0.40
codegen_flags: <defaults>
</compile_context>

<pallas_src>
import functools

import jax
import jax.numpy as jnp
from jax import lax
from jax.experimental import pallas as pl
from jax.experimental.pallas import tpu as pltpu

LN_EPS = 1e-5        # nn.LayerNorm default
SOFTMAX_EPS = 1e-7   # scatter_softmax default eps
NEG_BIG = -1e30      # finite "minus infinity" (avoids 0 * -inf = nan in masked paths)


def _round_up(x, m):
    return ((x + m - 1) // m) * m


def _vmem_limit(block_bytes, extra_bytes=0):
    """Explicit scoped-VMEM budget: >= 32 MiB (lifts v5e's 16 MiB default), <= 64 MiB (v7x)."""
    need = 2 * block_bytes + extra_bytes          # double-buffered blocks + scratch/temps
    need = int(need * 1.5) + (8 << 20)            # headroom for compiler temporaries
    return int(max(32 << 20, min(need, 64 << 20)))


def _edge_row_tile(e_pad):
    for cand in (1024, 512, 256, 128):
        if e_pad >= cand and e_pad % cand == 0:
            return cand
    return e_pad


# --------------------------------------------------------------------------------------
# Kernel 1: fused K / V linear projections, tiled over (padded, sorted) edges.
# K is stored pre-transposed as [D, E] so kernel 2 never transposes on the XLU.
# --------------------------------------------------------------------------------------
def edge_proj_kernel(k_ref, v_ref, wk_ref, bk_ref, wv_ref, bv_ref, kt_ref, vo_ref):
    k = jnp.dot(k_ref[...], wk_ref[...], preferred_element_type=jnp.float32) + bk_ref[...]
    kt_ref[...] = k.T.astype(kt_ref.dtype)                      # [D, te]
    vo_ref[...] = (jnp.dot(v_ref[...], wv_ref[...], preferred_element_type=jnp.float32)
                   + bv_ref[...]).astype(vo_ref.dtype)          # [te, D]


def edge_projection(k_in, v_in, wk_t, bk, wv_t, bv):
    E_pad, Dk = k_in.shape
    _, Dv = v_in.shape
    D = wk_t.shape[1]
    te = _edge_row_tile(E_pad)
    grid = (E_pad // te,)
    block_bytes = 4 * (te * Dk + te * Dv + Dk * D + Dv * D + 2 * D + D * te + te * D)
    return pl.pallas_call(
        edge_proj_kernel,
        out_shape=(jax.ShapeDtypeStruct((D, E_pad), jnp.float32),   # K^T
                   jax.ShapeDtypeStruct((E_pad, D), jnp.float32)),  # V
        grid_spec=pltpu.PrefetchScalarGridSpec(
            num_scalar_prefetch=0,
            grid=grid,
            in_specs=[
                pl.BlockSpec((te, Dk), lambda i: (i, 0)),
                pl.BlockSpec((te, Dv), lambda i: (i, 0)),
                pl.BlockSpec((Dk, D), lambda i: (0, 0)),
                pl.BlockSpec((1, D), lambda i: (0, 0)),
                pl.BlockSpec((Dv, D), lambda i: (0, 0)),
                pl.BlockSpec((1, D), lambda i: (0, 0)),
            ],
            out_specs=[
                pl.BlockSpec((D, te), lambda i: (0, i)),
                pl.BlockSpec((te, D), lambda i: (i, 0)),
            ],
        ),
        compiler_params=pltpu.CompilerParams(
            dimension_semantics=("parallel",),
            vmem_limit_bytes=_vmem_limit(block_bytes)),
    )(k_in, v_in, wk_t, bk.reshape(1, D), wv_t, bv.reshape(1, D))


# --------------------------------------------------------------------------------------
# Kernel 2: fused Q projection + CSR scatter-attention (online softmax over edge blocks)
#           + single output projection + LayerNorm, grid = (node tiles, edge blocks).
# --------------------------------------------------------------------------------------
def graph_attn_kernel(bs_ref, nb_ref,                                   # scalar prefetch
                      agg_ref, f_ref, wq_ref, bq_ref, kt_ref, v_ref,
                      wo_ref, bo_ref, gamma_ref, beta_ref, o_ref,
                      q_sc, m_sc, l_sc, acc_sc, *, n_heads):
    i = pl.program_id(0)
    j = pl.program_id(1)
    TL, D = f_ref.shape
    TE = v_ref.shape[0]
    dh = D // n_heads
    scale = dh ** -0.5

    @pl.when(j == 0)
    def _init():
        # Q projection once per node tile; stays resident across edge blocks.
        q_sc[...] = (jnp.dot(f_ref[...], wq_ref[...],
                             preferred_element_type=jnp.float32) + bq_ref[...])
        m_sc[...] = jnp.full_like(m_sc, NEG_BIG)
        l_sc[...] = jnp.zeros_like(l_sc)
        acc_sc[...] = jnp.zeros_like(acc_sc)

    @pl.when(j < nb_ref[i])
    def _edge_block():
        # Membership mask built in-kernel (shared across heads):
        #   in_group[r, e] = (agg_idx[e] == global node id of row r)
        node_ids = lax.broadcasted_iota(jnp.int32, (TL, TE), 0) + i * TL
        in_group = agg_ref[...] == node_ids                     # [TL, TE] bool
        a_f = in_group.astype(jnp.float32)                      # 0/1 mask (handles 0-degree)

        # TODO(synk): switch to lax.fori_loop(..., unroll=True) over heads if n_heads >= 8.
        for h in range(n_heads):
            sl = slice(h * dh, (h + 1) * dh)
            # Scores via pre-transposed K: no per-head XLU transpose.
            s = jnp.dot(q_sc[:, sl], kt_ref[sl, :],
                        preferred_element_type=jnp.float32) * scale       # [TL, TE]
            s = jnp.where(in_group, s, NEG_BIG)
            m_old = m_sc[h]                                               # [TL, 1]
            m_new = jnp.maximum(m_old, jnp.max(s, axis=-1, keepdims=True))
            alpha = jnp.exp(m_old - m_new)
            p = jnp.exp(s - m_new) * a_f                                  # masked exp
            l_sc[h] = alpha * l_sc[h] + jnp.sum(p, axis=-1, keepdims=True)
            acc_sc[:, sl] = alpha * acc_sc[:, sl] + jnp.dot(
                p, v_ref[:, sl], preferred_element_type=jnp.float32)      # [TL, dh]
            m_sc[h] = m_new

    @pl.when(j == pl.num_programs(1) - 1)
    def _finalize():
        # Per-head normalization written back into the [TL, D] accumulator ...
        for h in range(n_heads):
            sl = slice(h * dh, (h + 1) * dh)
            d = l_sc[h] + SOFTMAX_EPS
            inv = pl.reciprocal(d, approx=True)
            inv = inv * (2.0 - d * inv)          # one Newton step -> ~f32-exact, EUP path
            acc_sc[:, sl] = acc_sc[:, sl] * inv
        # ... then ONE full-depth output-projection matmul.
        y = jnp.dot(acc_sc[...], wo_ref[...],
                    preferred_element_type=jnp.float32) + bo_ref[...]
        # LayerNorm over the feature axis (dropout is identity at inference).
        mean = jnp.mean(y, axis=-1, keepdims=True)
        cent = y - mean
        var = jnp.mean(cent * cent, axis=-1, keepdims=True)
        y = cent * lax.rsqrt(var + LN_EPS)
        o_ref[...] = (y * gamma_ref[...] + beta_ref[...]).astype(o_ref.dtype)


def graph_attention_update(f, k_in, v_in, agg_idx, params, *, n_heads):
    """f: [L, D], k_in: [E, Dk], v_in: [E, Dv], agg_idx: [E] int. Returns [L, D]."""
    L, D = f.shape
    E = k_in.shape[0]
    assert D % n_heads == 0, "d_model must divide by n_heads"

    # ---- tiling / padding (no silent tile degradation) -------------------------------
    TL = min(256, _round_up(L, 8))
    L_pad = _round_up(L, TL)
    TE = 512 if E >= 512 else _round_up(E, 128)
    E_pad = _round_up(E, TE)
    n_tiles = L_pad // TL
    n_eblocks = E_pad // TE

    agg_idx = agg_idx.astype(jnp.int32)

    # ---- CSR bucketing: sort edges by destination node (XLA-side sort/gather) --------
    order = jnp.argsort(agg_idx)
    agg_s = agg_idx[order]
    k_s = k_in[order]
    v_s = v_in[order]
    pad_e = E_pad - E
    if pad_e:
        agg_p = jnp.concatenate([agg_s, jnp.full((pad_e,), L_pad, jnp.int32)])  # sentinel
    else:
        agg_p = agg_s
    k_p = jnp.pad(k_s, ((0, pad_e), (0, 0)))
    v_p = jnp.pad(v_s, ((0, pad_e), (0, 0)))

    counts = jax.ops.segment_sum(jnp.ones((E,), jnp.int32), agg_s, num_segments=L_pad)
    starts = jnp.cumsum(counts) - counts            # exclusive prefix sum
    ends = starts + counts
    tile_start = starts.reshape(n_tiles, TL)[:, 0]
    tile_end = ends.reshape(n_tiles, TL)[:, -1]
    block_start = tile_start // TE
    num_blocks = (tile_end + TE - 1) // TE - block_start       # per-tile edge-block count
    block_start = jnp.minimum(block_start, n_eblocks - 1).astype(jnp.int32)  # DMA-safe clamp
    num_blocks = num_blocks.astype(jnp.int32)

    # ---- kernel 1: edge-side K / V projections (K pre-transposed) --------------------
    kT, vv = edge_projection(k_p, v_p, params["wk_t"], params["bk"],
                             params["wv_t"], params["bv"])

    f_p = jnp.pad(f, ((0, L_pad - L), (0, 0)))
    agg_row = agg_p.reshape(1, E_pad)

    def _eblk(i, j, bs, nb):
        # Clamp skipped steps onto the last valid block so no new DMA is issued.
        return bs[i] + jnp.minimum(j, jnp.maximum(nb[i] - 1, 0))

    block_bytes = 4 * (TE + TL * D + 2 * D * D + 4 * D + D * TE + TE * D + TL * D)
    scratch_bytes = 4 * (2 * TL * D + 2 * n_heads * TL) + 6 * 4 * TL * TE

    kernel = functools.partial(graph_attn_kernel, n_heads=n_heads)
    out = pl.pallas_call(
        kernel,
        out_shape=jax.ShapeDtypeStruct((L_pad, D), f.dtype),
        grid_spec=pltpu.PrefetchScalarGridSpec(
            num_scalar_prefetch=2,
            grid=(n_tiles, n_eblocks),
            in_specs=[
                pl.BlockSpec((1, TE), lambda i, j, bs, nb: (0, _eblk(i, j, bs, nb))),   # agg
                pl.BlockSpec((TL, D), lambda i, j, bs, nb: (i, 0)),                     # f
                pl.BlockSpec((D, D), lambda i, j, bs, nb: (0, 0)),                      # Wq^T
                pl.BlockSpec((1, D), lambda i, j, bs, nb: (0, 0)),                      # bq
                pl.BlockSpec((D, TE), lambda i, j, bs, nb: (0, _eblk(i, j, bs, nb))),   # K^T
                pl.BlockSpec((TE, D), lambda i, j, bs, nb: (_eblk(i, j, bs, nb), 0)),   # V
                pl.BlockSpec((D, D), lambda i, j, bs, nb: (0, 0)),                      # Wout^T
                pl.BlockSpec((1, D), lambda i, j, bs, nb: (0, 0)),                      # bout
                pl.BlockSpec((1, D), lambda i, j, bs, nb: (0, 0)),                      # gamma
                pl.BlockSpec((1, D), lambda i, j, bs, nb: (0, 0)),                      # beta
            ],
            out_specs=pl.BlockSpec((TL, D), lambda i, j, bs, nb: (i, 0)),
            scratch_shapes=[
                pltpu.VMEM((TL, D), jnp.float32),            # projected Q
                pltpu.VMEM((n_heads, TL, 1), jnp.float32),   # running max per head
                pltpu.VMEM((n_heads, TL, 1), jnp.float32),   # running denom per head
                pltpu.VMEM((TL, D), jnp.float32),            # weighted-V accumulator
            ],
        ),
        compiler_params=pltpu.CompilerParams(
            dimension_semantics=("parallel", "arbitrary"),
            vmem_limit_bytes=_vmem_limit(block_bytes, scratch_bytes)),
    )(block_start, num_blocks, agg_row, f_p, params["wq_t"],
      params["bq"].reshape(1, D), kT, vv,
      params["wo_t"], params["bo"].reshape(1, D),
      params["gamma"].reshape(1, D), params["beta"].reshape(1, D))
    return out[:L]


# --------------------------------------------------------------------------------------
# Pure-JAX reference matching the PyTorch forward (eval mode).
# --------------------------------------------------------------------------------------
def graph_attention_update_ref(f, k_in, v_in, agg_idx, params, *, n_heads):
    L, D = f.shape
    E = k_in.shape[0]
    dh = D // n_heads
    scale = dh ** -0.5
    q = f @ params["wq_t"] + params["bq"]
    k = k_in @ params["wk_t"] + params["bk"]
    v = v_in @ params["wv_t"] + params["bv"]
    qh = q.reshape(L, n_heads, dh)
    kh = k.reshape(E, n_heads, dh)
    vh = v.reshape(E, n_heads, dh)
    attn = jnp.einsum("ehd,ehd->eh", qh[agg_idx], kh) * scale
    seg_max = jax.ops.segment_max(attn, agg_idx, num_segments=L)
    ex = jnp.exp(attn - seg_max[agg_idx])
    seg_sum = jax.ops.segment_sum(ex, agg_idx, num_segments=L)
    p = ex / (seg_sum[agg_idx] + SOFTMAX_EPS)
    vw = (vh * p[:, :, None]).reshape(E, D)
    agg = jax.ops.segment_sum(vw, agg_idx, num_segments=L)
    y = agg @ params["wo_t"] + params["bo"]
    mean = jnp.mean(y, axis=-1, keepdims=True)
    var = jnp.mean((y - mean) ** 2, axis=-1, keepdims=True)
    return (y - mean) / jnp.sqrt(var + LN_EPS) * params["gamma"] + params["beta"]


if __name__ == "__main__":
    key = jax.random.PRNGKey(0)
    L, E, D, H = 8, 16, 32, 4   # small shapes: 8 nodes, 16 edges, d_model=32, 4 heads

    keys = jax.random.split(key, 12)
    f = jax.random.normal(keys[0], (L, D), dtype=jnp.float32)
    k_in = jax.random.normal(keys[1], (E, D), dtype=jnp.float32)
    v_in = jax.random.normal(keys[2], (E, D), dtype=jnp.float32)
    agg_idx = jax.random.randint(keys[3], (E,), 0, L, dtype=jnp.int32)

    def lin_init(kw, kb, din, dout):
        # nn.Linear(din, dout): weight [dout, din] ~ U(-1/sqrt(din), 1/sqrt(din)); store W^T.
        bound = 1.0 / (din ** 0.5)
        w_t = jax.random.uniform(kw, (din, dout), jnp.float32, minval=-bound, maxval=bound)
        b = jax.random.uniform(kb, (dout,), jnp.float32, minval=-bound, maxval=bound)
        return w_t, b

    wq_t, bq = lin_init(keys[4], keys[5], D, D)
    wk_t, bk = lin_init(keys[6], keys[7], D, D)
    wv_t, bv = lin_init(keys[8], keys[9], D, D)
    wo_t, bo = lin_init(keys[10], keys[11], D, D)
    params = dict(wq_t=wq_t, bq=bq, wk_t=wk_t, bk=bk, wv_t=wv_t, bv=bv,
                  wo_t=wo_t, bo=bo,
                  gamma=jnp.ones((D,), jnp.float32),   # nn.LayerNorm defaults
                  beta=jnp.zeros((D,), jnp.float32))

    out = graph_attention_update(f, k_in, v_in, agg_idx, params, n_heads=H)
    out = jax.block_until_ready(out)

    ref = graph_attention_update_ref(f, k_in, v_in, agg_idx, params, n_heads=H)
    assert out.shape == (L, D)
    max_err = float(jnp.max(jnp.abs(out - ref)))
    assert jnp.allclose(out, ref, atol=1e-3, rtol=1e-3), \
        f"mismatch vs reference, max_err={max_err}"

    print("KERNEL_OK")
</pallas_src>

<mosaic_0001>
module attributes {stable_mosaic.version = 11 : i64} {
  func.func @edge_proj_kernel(%arg0: i32, %arg1: memref<128x32xf32, #tpu.memory_space<vmem>>, %arg2: memref<128x32xf32, #tpu.memory_space<vmem>>, %arg3: memref<32x32xf32, #tpu.memory_space<vmem>>, %arg4: memref<1x32xf32, #tpu.memory_space<vmem>>, %arg5: memref<32x32xf32, #tpu.memory_space<vmem>>, %arg6: memref<1x32xf32, #tpu.memory_space<vmem>>, %arg7: memref<32x128xf32, #tpu.memory_space<vmem>>, %arg8: memref<128x32xf32, #tpu.memory_space<vmem>>) attributes {dimension_semantics = [#tpu.dimension_semantics<parallel>], iteration_bounds = array<i64: 1>, scalar_prefetch = 0 : i64, scratch_operands = 0 : i64, tpu.core_type = #tpu.core_type<tc>, window_params = [{transform_indices = @transform_0, window_bounds = array<i64: 128, 32>}, {transform_indices = @transform_1, window_bounds = array<i64: 128, 32>}, {pipeline_mode = #tpu.pipeline_mode<synchronous>, transform_indices = @transform_2, window_bounds = array<i64: 32, 32>}, {pipeline_mode = #tpu.pipeline_mode<synchronous>, transform_indices = @transform_3, window_bounds = array<i64: 1, 32>}, {pipeline_mode = #tpu.pipeline_mode<synchronous>, transform_indices = @transform_4, window_bounds = array<i64: 32, 32>}, {pipeline_mode = #tpu.pipeline_mode<synchronous>, transform_indices = @transform_5, window_bounds = array<i64: 1, 32>}, {transform_indices = @transform_6, window_bounds = array<i64: 32, 128>}, {transform_indices = @transform_7, window_bounds = array<i64: 128, 32>}]} {
    %c0 = arith.constant 0 : index
    %c0_0 = arith.constant 0 : index
    %0 = vector.load %arg1[%c0, %c0_0] : memref<128x32xf32, #tpu.memory_space<vmem>>, vector<128x32xf32>
    %c0_1 = arith.constant 0 : index
    %c0_2 = arith.constant 0 : index
    %1 = vector.load %arg3[%c0_1, %c0_2] : memref<32x32xf32, #tpu.memory_space<vmem>>, vector<32x32xf32>
    %cst = arith.constant dense<0.000000e+00> : vector<128x32xf32>
    %2 = tpu.matmul %0, %1, %cst {dimension_numbers = #tpu.dot_dimension_numbers<[1], [0], [0], [1], [0, 0, 1, 1], [], []>} : vector<128x32xf32>, vector<32x32xf32>, vector<128x32xf32> -> vector<128x32xf32>
    %c0_3 = arith.constant 0 : index
    %c0_4 = arith.constant 0 : index
    %3 = vector.load %arg4[%c0_3, %c0_4] : memref<1x32xf32, #tpu.memory_space<vmem>>, vector<1x32xf32>
    %4 = vector.broadcast %3 : vector<1x32xf32> to vector<128x32xf32>
    %5 = arith.addf %2, %4 : vector<128x32xf32>
    %6 = tpu.transpose %5, [1, 0] : vector<128x32xf32> -> vector<32x128xf32>
    %c0_5 = arith.constant 0 : index
    %c0_6 = arith.constant 0 : index
    %7 = vector.load %arg7[%c0_5, %c0_6] : memref<32x128xf32, #tpu.memory_space<vmem>>, vector<32x128xf32>
    tpu.vector_store %arg7[%c0_5, %c0_6], %6 {strides = array<i32>} : memref<32x128xf32, #tpu.memory_space<vmem>>, vector<32x128xf32>,
    %c0_7 = arith.constant 0 : index
    %c0_8 = arith.constant 0 : index
    %8 = vector.load %arg2[%c0_7, %c0_8] : memref<128x32xf32, #tpu.memory_space<vmem>>, vector<128x32xf32>
    %c0_9 = arith.constant 0 : index
    %c0_10 = arith.constant 0 : index
    %9 = vector.load %arg5[%c0_9, %c0_10] : memref<32x32xf32, #tpu.memory_space<vmem>>, vector<32x32xf32>
    %cst_11 = arith.constant dense<0.000000e+00> : vector<128x32xf32>
    %10 = tpu.matmul %8, %9, %cst_11 {dimension_numbers = #tpu.dot_dimension_numbers<[1], [0], [0], [1], [0, 0, 1, 1], [], []>} : vector<128x32xf32>, vector<32x32xf32>, vector<128x32xf32> -> vector<128x32xf32>
    %c0_12 = arith.constant 0 : index
    %c0_13 = arith.constant 0 : index
    %11 = vector.load %arg6[%c0_12, %c0_13] : memref<1x32xf32, #tpu.memory_space<vmem>>, vector<1x32xf32>
    %12 = vector.broadcast %11 : vector<1x32xf32> to vector<128x32xf32>
    %13 = arith.addf %10, %12 : vector<128x32xf32>
    %c0_14 = arith.constant 0 : index
    %c0_15 = arith.constant 0 : index
    %14 = vector.load %arg8[%c0_14, %c0_15] : memref<128x32xf32, #tpu.memory_space<vmem>>, vector<128x32xf32>
    tpu.vector_store %arg8[%c0_14, %c0_15], %13 {strides = array<i32>} : memref<128x32xf32, #tpu.memory_space<vmem>>, vector<128x32xf32>,
    return
  }
  func.func @transform_0(%arg0: i32) -> (i32, i32) {
    %c0_i32 = arith.constant 0 : i32
    %c0_i32_0 = arith.constant 0 : i32
    return %arg0, %c0_i32 : i32, i32
  }
  func.func @transform_1(%arg0: i32) -> (i32, i32) {
    %c0_i32 = arith.constant 0 : i32
    %c0_i32_0 = arith.constant 0 : i32
    return %arg0, %c0_i32 : i32, i32
  }
  func.func @transform_2(%arg0: i32) -> (i32, i32) {
    %c0_i32 = arith.constant 0 : i32
    %c0_i32_0 = arith.constant 0 : i32
    %c0_i32_1 = arith.constant 0 : i32
    return %c0_i32, %c0_i32_0 : i32, i32
  }
  func.func @transform_3(%arg0: i32) -> (i32, i32) {
    %c0_i32 = arith.constant 0 : i32
    %c0_i32_0 = arith.constant 0 : i32
    %c0_i32_1 = arith.constant 0 : i32
    return %c0_i32, %c0_i32_0 : i32, i32
  }
  func.func @transform_4(%arg0: i32) -> (i32, i32) {
    %c0_i32 = arith.constant 0 : i32
    %c0_i32_0 = arith.constant 0 : i32
    %c0_i32_1 = arith.constant 0 : i32
    return %c0_i32, %c0_i32_0 : i32, i32
  }
  func.func @transform_5(%arg0: i32) -> (i32, i32) {
    %c0_i32 = arith.constant 0 : i32
    %c0_i32_0 = arith.constant 0 : i32
    %c0_i32_1 = arith.constant 0 : i32
    return %c0_i32, %c0_i32_0 : i32, i32
  }
  func.func @transform_6(%arg0: i32) -> (i32, i32) {
    %c0_i32 = arith.constant 0 : i32
    %c0_i32_0 = arith.constant 0 : i32
    return %c0_i32, %arg0 : i32, i32
  }
  func.func @transform_7(%arg0: i32) -> (i32, i32) {
    %c0_i32 = arith.constant 0 : i32
    %c0_i32_0 = arith.constant 0 : i32
    return %arg0, %c0_i32 : i32, i32
  }
}

</mosaic_0001>

<llo_original>
// kernel: tpu_custom_call.1
$region0: #{tpu_custom_call.1}
  #allocation0 [shape = 'u32[]', space=smem, size = 0x4, offset = 0x4, fixed_abs, tag = 'smem constant byte address 0x4 - core index']
  #allocation1 [shape = 'u32[144,128]{1,0:T(1,128)}', space=vmem, size = 0x12000, scoped, tag = 'internal scratch']
  %s0 = inlined_call_operand.vmem [shape: f32[128,32], index: 0, kind: input, shape index: {}]
  %s1 = inlined_call_operand.vmem [shape: f32[128,32], index: 1, kind: input, shape index: {}]
  %s2 = inlined_call_operand.vmem [shape: f32[32,32], index: 2, kind: input, shape index: {}]
  %s3 = inlined_call_operand.vmem [shape: f32[1,32], index: 3, kind: input, shape index: {}]
  %s4 = inlined_call_operand.vmem [shape: f32[32,32], index: 4, kind: input, shape index: {}]
  %s5 = inlined_call_operand.vmem [shape: f32[1,32], index: 5, kind: input, shape index: {}]
  %s6 = inlined_call_operand.hbm [shape: f32[32,128], index: 6, kind: output, shape index: {0}]
  %s7 = inlined_call_operand.vmem [shape: f32[128,32], index: 7, kind: output, shape index: {1}]
  %8 = xla_tuple %s6, %s7
  %s9 = sld [smem:[#allocation0]]
  $region42: #{tpu_custom_call.1} parent=0
    _
  %s11 = ssub.s32 1, %s9
  %s12 = scalar_select 0, %s11, %s9
  $region1: #{tpu_custom_call.1} parent=0
    #allocation2 [shape = 'u8[16384]{0}', space=vmem, size = 0x4000, scoped, tag = 'output window, operand 0, single buffered']
    #allocation3 [shape = 's32[1]{0}', space=sflag, size = 0x4, scoped, tag = 'scoped memory for tpu_custom_call.1']
    %13 = vsyncpa [#allocation3], 0
    // Predicated region
    $region2: #{tpu_custom_call.1} parent=1 // pred_check
      _
    $region3: #{tpu_custom_call.1} parent=1 // pred_check_branch
      %15 = sbr.rel (0) target = $region5
    $region4: #{tpu_custom_call.1} parent=1 // pred_region
      _
    $region5: #{tpu_custom_call.1} parent=1 // pred_fallthru
      _
    // Predicated region
    $region6: #{tpu_custom_call.1} parent=1 // pred_check
      _
    $region7: #{tpu_custom_call.1} parent=1 // pred_check_branch
      %17 = sbr.rel (0) target = $region9
    $region8: #{tpu_custom_call.1} parent=1 // pred_region
      _
    $region9: #{tpu_custom_call.1} parent=1 // pred_fallthru
      _
    // Predicated region
    $region10: #{tpu_custom_call.1} parent=1 // pred_check
      _
    $region11: #{tpu_custom_call.1} parent=1 // pred_check_branch
      %19 = sbr.rel (0) target = $region13
    $region12: #{tpu_custom_call.1} parent=1 // pred_region
      _
    $region13: #{tpu_custom_call.1} parent=1 // pred_fallthru
      _
    // Predicated region
    $region14: #{tpu_custom_call.1} parent=1 // pred_check
      _
    $region15: #{tpu_custom_call.1} parent=1 // pred_check_branch
      %21 = sbr.rel (0) target = $region17
    $region16: #{tpu_custom_call.1} parent=1 // pred_region
      _
    $region17: #{tpu_custom_call.1} parent=1 // pred_fallthru
      _
    // Predicated region
    $region18: #{tpu_custom_call.1} parent=1 // pred_check
      _
    $region19: #{tpu_custom_call.1} parent=1 // pred_check_branch
      %23 = sbr.rel (0) target = $region21
    $region20: #{tpu_custom_call.1} parent=1 // pred_region
      _
    $region21: #{tpu_custom_call.1} parent=1 // pred_fallthru
      _
    // Predicated region
    $region22: #{tpu_custom_call.1} parent=1 // pred_check
      _
    $region23: #{tpu_custom_call.1} parent=1 // pred_check_branch
      %25 = sbr.rel (0) target = $region25
    $region24: #{tpu_custom_call.1} parent=1 // pred_region
      _
    $region25: #{tpu_custom_call.1} parent=1 // pred_fallthru
      _
    %v26 = vld [vmem:[%s0] sm:$0xff]
    %v27 = vld [vmem:[%s0 + $0x8] sm:$0xff]
    %v28 = vld [vmem:[%s0 + $0x10] sm:$0xff]
    %v29 = vld [vmem:[%s0 + $0x18] sm:$0xff]
    %v30 = vld [vmem:[%s0 + $0x20] sm:$0xff]
    %v31 = vld [vmem:[%s0 + $0x28] sm:$0xff]
    %v32 = vld [vmem:[%s0 + $0x30] sm:$0xff]
    %v33 = vld [vmem:[%s0 + $0x38] sm:$0xff]
    %v34 = vld [vmem:[%s0 + $0x40] sm:$0xff]
    %v35 = vld [vmem:[%s0 + $0x48] sm:$0xff]
    %v36 = vld [vmem:[%s0 + $0x50] sm:$0xff]
    %v37 = vld [vmem:[%s0 + $0x58] sm:$0xff]
    %v38 = vld [vmem:[%s0 + $0x60] sm:$0xff]
    %v39 = vld [vmem:[%s0 + $0x68] sm:$0xff]
    %v40 = vld [vmem:[%s0 + $0x70] sm:$0xff]
    %v41 = vld [vmem:[%s0 + $0x78] sm:$0xff]
    %v42 = vld [vmem:[%s2] sm:$0xff]
    %v43 = vld [vmem:[%s2 + $0x8] sm:$0xff]
    %v44 = vld [vmem:[%s2 + $0x10] sm:$0xff]
    %v45 = vld [vmem:[%s2 + $0x18] sm:$0xff]
    %v46 = vld [vmem:[%s3] sm:$0x1]
    %v48 = vlaneseq
    %v49 = vshrl.u32 %v48, 7
    %v50 = vsub.s32 0, %v49
    %v51 = vrot.slane %v46, %v50
    %vm53 = vcmask 261120
    %v55 = vsel %vm53, %v26, 0
    %v58 = vsel %vm53, %v27, 0
    %v61 = vsel %vm53, %v28, 0
    %v64 = vsel %vm53, %v29, 0
    %v67 = vsel %vm53, %v30, 0
    %v70 = vsel %vm53, %v31, 0
    %v73 = vsel %vm53, %v32, 0
    %v76 = vsel %vm53, %v33, 0
    %v79 = vsel %vm53, %v34, 0
    %v82 = vsel %vm53, %v35, 0
    %v85 = vsel %vm53, %v36, 0
    %v88 = vsel %vm53, %v37, 0
    %v91 = vsel %vm53, %v38, 0
    %v94 = vsel %vm53, %v39, 0
    %v97 = vsel %vm53, %v40, 0
    %v100 = vsel %vm53, %v41, 0
    %102 = vmatprep.subr.mxu0 0.0
    %103 = vmatpush1.msra.mxu0 0.0
    %104 = vmatprep.subr.mxu0 0.0
    %105 = vmatpush1.msra.mxu0 0.0
    %106 = vmatprep.subr.mxu0 0.0
    %107 = vmatpush1.msra.mxu0 0.0
    %108 = vmatprep.subr.mxu0 0.0
    %109 = vmatpush1.msra.mxu0 0.0
    %110 = vmatprep.subr.mxu0 0.0
    %111 = vmatpush1.msra.mxu0 0.0
    %112 = vmatprep.subr.mxu0 0.0
    %113 = vmatpush1.msra.mxu0 0.0
    %114 = vmatprep.subr.mxu0 0.0
    %115 = vmatpush1.msra.mxu0 0.0
    %116 = vmatprep.subr.mxu0 0.0
    %117 = vmatpush1.msra.mxu0 0.0
    %118 = vmatprep.subr.mxu0 0.0
    %119 = vmatpush1.msra.mxu0 0.0
    %120 = vmatprep.subr.mxu0 0.0
    %121 = vmatpush1.msra.mxu0 0.0
    %122 = vmatprep.subr.mxu0 0.0
    %123 = vmatpush1.msra.mxu0 0.0
    %124 = vmatprep.subr.mxu0 0.0
    %125 = vmatpush1.msra.mxu0 0.0
    %126 = vmatprep.subr.mxu0 0.0
    %127 = vmatpush1.msra.mxu0 %v45
    %128 = vmatprep.subr.mxu0 0.0
    %129 = vmatpush1.msra.mxu0 %v44
    %130 = vmatprep.subr.mxu0 0.0
    %131 = vmatpush1.msra.mxu0 %v43
    %132 = vmatprep.subr.mxu0 0.0
    %133 = vmatpush1.msra.mxu0 %v42
    %134 = vmatprep.subr.mxu0 0.0
    %135 = vmatpush2.msra.mxu0 0.0
    %136 = vmatprep.subr.mxu0 0.0
    %137 = vmatpush2.msra.mxu0 0.0
    %138 = vmatprep.subr.mxu0 0.0
    %139 = vmatpush2.msra.mxu0 0.0
    %140 = vmatprep.subr.mxu0 0.0
    %141 = vmatpush2.msra.mxu0 0.0
    %142 = vmatprep.subr.mxu0 0.0
    %143 = vmatpush2.msra.mxu0 0.0
    %144 = vmatprep.subr.mxu0 0.0
    %145 = vmatpush2.msra.mxu0 0.0
    %146 = vmatprep.subr.mxu0 0.0
    %147 = vmatpush2.msra.mxu0 0.0
    %148 = vmatprep.subr.mxu0 0.0
    %149 = vmatpush2.msra.mxu0 0.0
    %150 = vmatprep.subr.mxu0 0.0
    %151 = vmatpush2.msra.mxu0 0.0
    %152 = vmatprep.subr.mxu0 0.0
    %153 = vmatpush2.msra.mxu0 0.0
    %154 = vmatprep.subr.mxu0 0.0
    %155 = vmatpush2.msra.mxu0 0.0
    %156 = vmatprep.subr.mxu0 0.0
    %157 = vmatpush2.msra.mxu0 0.0
    %158 = vmatprep.subr.mxu0 0.0
    %159 = vmatpush2.msra.mxu0 0.0
    %160 = vmatprep.subr.mxu0 0.0
    %161 = vmatpush2.msra.mxu0 0.0
    %162 = vmatprep.subr.mxu0 0.0
    %163 = vmatpush2.msra.mxu0 0.0
    %164 = vmatprep.subr.mxu0 0.0
    %165 = vmatpush2.msra.mxu0 0.0
    %166 = vmatprep.mubr.f32.mxu0 0.0
    %167 = vmatmul.mubr.f32.gmra.mxu0 %v55
    %v168 = vpop.f32.mrf.mxu0
    %v169 = vadd.f32 %v51, %v168
    %v170 = vpop.f32.mrf.mxu0
    %171 = vmatprep.mubr.f32.mxu0 0.0
    %172 = vmatmul.mubr.f32.gmra.mxu0 %v58
    %v173 = vpop.f32.mrf.mxu0
    %v174 = vadd.f32 %v51, %v173
    %v175 = vpop.f32.mrf.mxu0
    %176 = vmatprep.mubr.f32.mxu0 0.0
    %177 = vmatmul.mubr.f32.gmra.mxu0 %v61
    %v178 = vpop.f32.mrf.mxu0
    %v179 = vadd.f32 %v51, %v178
    %v180 = vpop.f32.mrf.mxu0
    %181 = vmatprep.mubr.f32.mxu0 0.0
    %182 = vmatmul.mubr.f32.gmra.mxu0 %v64
    %v183 = vpop.f32.mrf.mxu0
    %v184 = vadd.f32 %v51, %v183
    %v185 = vpop.f32.mrf.mxu0
    %186 = vmatprep.mubr.f32.mxu0 0.0
    %187 = vmatmul.mubr.f32.gmra.mxu0 %v67
    %v188 = vpop.f32.mrf.mxu0
    %v189 = vadd.f32 %v51, %v188
    %v190 = vpop.f32.mrf.mxu0
    %191 = vmatprep.mubr.f32.mxu0 0.0
    %192 = vmatmul.mubr.f32.gmra.mxu0 %v70
    %v193 = vpop.f32.mrf.mxu0
    %v194 = vadd.f32 %v51, %v193
    %v195 = vpop.f32.mrf.mxu0
    %196 = vmatprep.mubr.f32.mxu0 0.0
    %197 = vmatmul.mubr.f32.gmra.mxu0 %v73
    %v198 = vpop.f32.mrf.mxu0
    %v199 = vadd.f32 %v51, %v198
    %v200 = vpop.f32.mrf.mxu0
    %201 = vmatprep.mubr.f32.mxu0 0.0
    %202 = vmatmul.mubr.f32.gmra.mxu0 %v76
    %v203 = vpop.f32.mrf.mxu0
    %v204 = vadd.f32 %v51, %v203
    %v205 = vpop.f32.mrf.mxu0
    %206 = vmatprep.mubr.f32.mxu0 0.0
    %207 = vmatmul.mubr.f32.gmra.mxu0 %v79
    %v208 = vpop.f32.mrf.mxu0
    %v209 = vadd.f32 %v51, %v208
    %v210 = vpop.f32.mrf.mxu0
    %211 = vmatprep.mubr.f32.mxu0 0.0
    %212 = vmatmul.mubr.f32.gmra.mxu0 %v82
    %v213 = vpop.f32.mrf.mxu0
    %v214 = vadd.f32 %v51, %v213
    %v215 = vpop.f32.mrf.mxu0
    %216 = vmatprep.mubr.f32.mxu0 0.0
    %217 = vmatmul.mubr.f32.gmra.mxu0 %v85
    %v218 = vpop.f32.mrf.mxu0
    %v219 = vadd.f32 %v51, %v218
    %v220 = vpop.f32.mrf.mxu0
    %221 = vmatprep.mubr.f32.mxu0 0.0
    %222 = vmatmul.mubr.f32.gmra.mxu0 %v88
    %v223 = vpop.f32.mrf.mxu0
    %v224 = vadd.f32 %v51, %v223
    %v225 = vpop.f32.mrf.mxu0
    %226 = vmatprep.mubr.f32.mxu0 0.0
    %227 = vmatmul.mubr.f32.gmra.mxu0 %v91
    %v228 = vpop.f32.mrf.mxu0
    %v229 = vadd.f32 %v51, %v228
    %v230 = vpop.f32.mrf.mxu0
    %231 = vmatprep.mubr.f32.mxu0 0.0
    %232 = vmatmul.mubr.f32.gmra.mxu0 %v94
    %v233 = vpop.f32.mrf.mxu0
    %v234 = vadd.f32 %v51, %v233
    %v235 = vpop.f32.mrf.mxu0
    %236 = vmatprep.mubr.f32.mxu0 0.0
    %237 = vmatmul.mubr.f32.gmra.mxu0 %v97
    %v238 = vpop.f32.mrf.mxu0
    %v239 = vadd.f32 %v51, %v238
    %v240 = vpop.f32.mrf.mxu0
    %241 = vmatprep.mubr.f32.mxu0 0.0
    %242 = vmatmul.mubr.f32.gmra.mxu0 %v100
    %v243 = vpop.f32.mrf.mxu0
    %v244 = vadd.f32 %v51, %v243
    %v245 = vpop.f32.mrf.mxu0
    %246 = vdwg.mxu0
    %247 = vxpose.xlu0.b32.start [1/16] %v169, 128
    %248 = vxpose.xlu0.b32.cont [2/16] %v174, 128
    %249 = vxpose.xlu0.b32.cont [3/16] %v179, 128
    %250 = vxpose.xlu0.b32.cont [4/16] %v184, 128
    %251 = vxpose.xlu0.b32.cont [5/16] %v189, 128
    %252 = vxpose.xlu0.b32.cont [6/16] %v194, 128
    %253 = vxpose.xlu0.b32.cont [7/16] %v199, 128
    %254 = vxpose.xlu0.b32.cont [8/16] %v204, 128
    %255 = vxpose.xlu0.b32.cont [9/16] %v209, 128
    %256 = vxpose.xlu0.b32.cont [10/16] %v214, 128
    %257 = vxpose.xlu0.b32.cont [11/16] %v219, 128
    %258 = vxpose.xlu0.b32.cont [12/16] %v224, 128
    %259 = vxpose.xlu0.b32.cont [13/16] %v229, 128
    %260 = vxpose.xlu0.b32.cont [14/16] %v234, 128
    %261 = vxpose.xlu0.b32.cont [15/16] %v239, 128
    %262 = vxpose.xlu0.b32.end [16/16] %v244, 128
    %v263 = vpop.trf.xlu0
    %v264 = vpop.trf.xlu0
    %v265 = vpop.trf.xlu0
    %v266 = vpop.trf.xlu0
    %v267 = vpop.trf.xlu0
    %v268 = vpop.trf.xlu0
    %v269 = vpop.trf.xlu0
    %v270 = vpop.trf.xlu0
    %v271 = vpop.trf.xlu0
    %v272 = vpop.trf.xlu0
    %v273 = vpop.trf.xlu0
    %v274 = vpop.trf.xlu0
    %v275 = vpop.trf.xlu0
    %v276 = vpop.trf.xlu0
    %v277 = vpop.trf.xlu0
    %v278 = vpop.trf.xlu0
    %279 = vst [vmem:[#allocation2] sm:$0xff] %v263
    %280 = vst [vmem:[#allocation2 + $0x8] sm:$0xff] %v264
    %281 = vst [vmem:[#allocation2 + $0x10] sm:$0xff] %v265
    %282 = vst [vmem:[#allocation2 + $0x18] sm:$0xff] %v266
    %v283 = vld [vmem:[%s1] sm:$0xff]
    %v284 = vld [vmem:[%s1 + $0x8] sm:$0xff]
    %v285 = vld [vmem:[%s1 + $0x10] sm:$0xff]
    %v286 = vld [vmem:[%s1 + $0x18] sm:$0xff]
    %v287 = vld [vmem:[%s1 + $0x20] sm:$0xff]
    %v288 = vld [vmem:[%s1 + $0x28] sm:$0xff]
    %v289 = vld [vmem:[%s1 + $0x30] sm:$0xff]
    %v290 = vld [vmem:[%s1 + $0x38] sm:$0xff]
    %v291 = vld [vmem:[%s1 + $0x40] sm:$0xff]
    %v292 = vld [vmem:[%s1 + $0x48] sm:$0xff]
    %v293 = vld [vmem:[%s1 + $0x50] sm:$0xff]
    %v294 = vld [vmem:[%s1 + $0x58] sm:$0xff]
    %v295 = vld [vmem:[%s1 + $0x60] sm:$0xff]
    %v296 = vld [vmem:[%s1 + $0x68] sm:$0xff]
    %v297 = vld [vmem:[%s1 + $0x70] sm:$0xff]
    %v298 = vld [vmem:[%s1 + $0x78] sm:$0xff]
    %v299 = vld [vmem:[%s4] sm:$0xff]
    %v300 = vld [vmem:[%s4 + $0x8] sm:$0xff]
    %v301 = vld [vmem:[%s4 + $0x10] sm:$0xff]
    %v302 = vld [vmem:[%s4 + $0x18] sm:$0xff]
    %v303 = vld [vmem:[%s5] sm:$0x1]
    %v305 = vlaneseq
    %v306 = vshrl.u32 %v305, 7
    %v307 = vsub.s32 0, %v306
    %v308 = vrot.slane %v303, %v307
    %v311 = vsel %vm53, %v283, 0
    %v314 = vsel %vm53, %v284, 0
    %v317 = vsel %vm53, %v285, 0
    %v320 = vsel %vm53, %v286, 0
    %v323 = vsel %vm53, %v287, 0
    %v326 = vsel %vm53, %v288, 0
    %v329 = vsel %vm53, %v289, 0
    %v332 = vsel %vm53, %v290, 0
    %v335 = vsel %vm53, %v291, 0
    %v338 = vsel %vm53, %v292, 0
    %v341 = vsel %vm53, %v293, 0
    %v344 = vsel %vm53, %v294, 0
    %v347 = vsel %vm53, %v295, 0
    %v350 = vsel %vm53, %v296, 0
    %v353 = vsel %vm53, %v297, 0
    %v356 = vsel %vm53, %v298, 0
    %358 = vmatprep.subr.mxu0 0.0
    %359 = vmatpush1.msra.mxu0 0.0
    %360 = vmatprep.subr.mxu0 0.0
    %361 = vmatpush1.msra.mxu0 0.0
    %362 = vmatprep.subr.mxu0 0.0
    %363 = vmatpush1.msra.mxu0 0.0
    %364 = vmatprep.subr.mxu0 0.0
    %365 = vmatpush1.msra.mxu0 0.0
    %366 = vmatprep.subr.mxu0 0.0
    %367 = vmatpush1.msra.mxu0 0.0
    %368 = vmatprep.subr.mxu0 0.0
    %369 = vmatpush1.msra.mxu0 0.0
    %370 = vmatprep.subr.mxu0 0.0
    %371 = vmatpush1.msra.mxu0 0.0
    %372 = vmatprep.subr.mxu0 0.0
    %373 = vmatpush1.msra.mxu0 0.0
    %374 = vmatprep.subr.mxu0 0.0
    %375 = vmatpush1.msra.mxu0 0.0
    %376 = vmatprep.subr.mxu0 0.0
    %377 = vmatpush1.msra.mxu0 0.0
    %378 = vmatprep.subr.mxu0 0.0
    %379 = vmatpush1.msra.mxu0 0.0
    %380 = vmatprep.subr.mxu0 0.0
    %381 = vmatpush1.msra.mxu0 0.0
    %382 = vmatprep.subr.mxu0 0.0
    %383 = vmatpush1.msra.mxu0 %v302
    %384 = vmatprep.subr.mxu0 0.0
    %385 = vmatpush1.msra.mxu0 %v301
    %386 = vmatprep.subr.mxu0 0.0
    %387 = vmatpush1.msra.mxu0 %v300
    %388 = vmatprep.subr.mxu0 0.0
    %389 = vmatpush1.msra.mxu0 %v299
    %390 = vmatprep.subr.mxu0 0.0
    %391 = vmatpush2.msra.mxu0 0.0
    %392 = vmatprep.subr.mxu0 0.0
    %393 = vmatpush2.msra.mxu0 0.0
    %394 = vmatprep.subr.mxu0 0.0
    %395 = vmatpush2.msra.mxu0 0.0
    %396 = vmatprep.subr.mxu0 0.0
    %397 = vmatpush2.msra.mxu0 0.0
    %398 = vmatprep.subr.mxu0 0.0
    %399 = vmatpush2.msra.mxu0 0.0
    %400 = vmatprep.subr.mxu0 0.0
    %401 = vmatpush2.msra.mxu0 0.0
    %402 = vmatprep.subr.mxu0 0.0
    %403 = vmatpush2.msra.mxu0 0.0
    %404 = vmatprep.subr.mxu0 0.0
    %405 = vmatpush2.msra.mxu0 0.0
    %406 = vmatprep.subr.mxu0 0.0
    %407 = vmatpush2.msra.mxu0 0.0
    %408 = vmatprep.subr.mxu0 0.0
    %409 = vmatpush2.msra.mxu0 0.0
    %410 = vmatprep.subr.mxu0 0.0
    %411 = vmatpush2.msra.mxu0 0.0
    %412 = vmatprep.subr.mxu0 0.0
    %413 = vmatpush2.msra.mxu0 0.0
    %414 = vmatprep.subr.mxu0 0.0
    %415 = vmatpush2.msra.mxu0 0.0
    %416 = vmatprep.subr.mxu0 0.0
    %417 = vmatpush2.msra.mxu0 0.0
    %418 = vmatprep.subr.mxu0 0.0
    %419 = vmatpush2.msra.mxu0 0.0
    %420 = vmatprep.subr.mxu0 0.0
    %421 = vmatpush2.msra.mxu0 0.0
    %422 = vmatprep.mubr.f32.mxu0 0.0
    %423 = vmatmul.mubr.f32.gmra.mxu0 %v311
    %v424 = vpop.f32.mrf.mxu0
    %v425 = vadd.f32 %v308, %v424
    %v426 = vpop.f32.mrf.mxu0
    %427 = vmatprep.mubr.f32.mxu0 0.0
    %428 = vmatmul.mubr.f32.gmra.mxu0 %v314
    %v429 = vpop.f32.mrf.mxu0
    %v430 = vadd.f32 %v308, %v429
    %v431 = vpop.f32.mrf.mxu0
    %432 = vmatprep.mubr.f32.mxu0 0.0
    %433 = vmatmul.mubr.f32.gmra.mxu0 %v317
    %v434 = vpop.f32.mrf.mxu0
    %v435 = vadd.f32 %v308, %v434
    %v436 = vpop.f32.mrf.mxu0
    %437 = vmatprep.mubr.f32.mxu0 0.0
    %438 = vmatmul.mubr.f32.gmra.mxu0 %v320
    %v439 = vpop.f32.mrf.mxu0
    %v440 = vadd.f32 %v308, %v439
    %v441 = vpop.f32.mrf.mxu0
    %442 = vmatprep.mubr.f32.mxu0 0.0
    %443 = vmatmul.mubr.f32.gmra.mxu0 %v323
    %v444 = vpop.f32.mrf.mxu0
    %v445 = vadd.f32 %v308, %v444
    %v446 = vpop.f32.mrf.mxu0
    %447 = vmatprep.mubr.f32.mxu0 0.0
    %448 = vmatmul.mubr.f32.gmra.mxu0 %v326
    %v449 = vpop.f32.mrf.mxu0
    %v450 = vadd.f32 %v308, %v449
    %v451 = vpop.f32.mrf.mxu0
    %452 = vmatprep.mubr.f32.mxu0 0.0
    %453 = vmatmul.mubr.f32.gmra.mxu0 %v329
    %v454 = vpop.f32.mrf.mxu0
    %v455 = vadd.f32 %v308, %v454
    %v456 = vpop.f32.mrf.mxu0
    %457 = vmatprep.mubr.f32.mxu0 0.0
    %458 = vmatmul.mubr.f32.gmra.mxu0 %v332
    %v459 = vpop.f32.mrf.mxu0
    %v460 = vadd.f32 %v308, %v459
    %v461 = vpop.f32.mrf.mxu0
    %462 = vmatprep.mubr.f32.mxu0 0.0
    %463 = vmatmul.mubr.f32.gmra.mxu0 %v335
    %v464 = vpop.f32.mrf.mxu0
    %v465 = vadd.f32 %v308, %v464
    %v466 = vpop.f32.mrf.mxu0
    %467 = vmatprep.mubr.f32.mxu0 0.0
    %468 = vmatmul.mubr.f32.gmra.mxu0 %v338
    %v469 = vpop.f32.mrf.mxu0
    %v470 = vadd.f32 %v308, %v469
    %v471 = vpop.f32.mrf.mxu0
    %472 = vmatprep.mubr.f32.mxu0 0.0
    %473 = vmatmul.mubr.f32.gmra.mxu0 %v341
    %v474 = vpop.f32.mrf.mxu0
    %v475 = vadd.f32 %v308, %v474
    %v476 = vpop.f32.mrf.mxu0
    %477 = vmatprep.mubr.f32.mxu0 0.0
    %478 = vmatmul.mubr.f32.gmra.mxu0 %v344
    %v479 = vpop.f32.mrf.mxu0
    %v480 = vadd.f32 %v308, %v479
    %v481 = vpop.f32.mrf.mxu0
    %482 = vmatprep.mubr.f32.mxu0 0.0
    %483 = vmatmul.mubr.f32.gmra.mxu0 %v347
    %v484 = vpop.f32.mrf.mxu0
    %v485 = vadd.f32 %v308, %v484
    %v486 = vpop.f32.mrf.mxu0
    %487 = vmatprep.mubr.f32.mxu0 0.0
    %488 = vmatmul.mubr.f32.gmra.mxu0 %v350
    %v489 = vpop.f32.mrf.mxu0
    %v490 = vadd.f32 %v308, %v489
    %v491 = vpop.f32.mrf.mxu0
    %492 = vmatprep.mubr.f32.mxu0 0.0
    %493 = vmatmul.mubr.f32.gmra.mxu0 %v353
    %v494 = vpop.f32.mrf.mxu0
    %v495 = vadd.f32 %v308, %v494
    %v496 = vpop.f32.mrf.mxu0
    %497 = vmatprep.mubr.f32.mxu0 0.0
    %498 = vmatmul.mubr.f32.gmra.mxu0 %v356
    %v499 = vpop.f32.mrf.mxu0
    %v500 = vadd.f32 %v308, %v499
    %v501 = vpop.f32.mrf.mxu0
    %502 = vdwg.mxu0
    %503 = vst.msk [vmem:[%s7] sm:$0xff] %vm53, %v425
    %504 = vst.msk [vmem:[%s7 + $0x8] sm:$0xff] %vm53, %v430
    %505 = vst.msk [vmem:[%s7 + $0x10] sm:$0xff] %vm53, %v435
    %506 = vst.msk [vmem:[%s7 + $0x18] sm:$0xff] %vm53, %v440
    %507 = vst.msk [vmem:[%s7 + $0x20] sm:$0xff] %vm53, %v445
    %508 = vst.msk [vmem:[%s7 + $0x28] sm:$0xff] %vm53, %v450
    %509 = vst.msk [vmem:[%s7 + $0x30] sm:$0xff] %vm53, %v455
    %510 = vst.msk [vmem:[%s7 + $0x38] sm:$0xff] %vm53, %v460
    %511 = vst.msk [vmem:[%s7 + $0x40] sm:$0xff] %vm53, %v465
    %512 = vst.msk [vmem:[%s7 + $0x48] sm:$0xff] %vm53, %v470
    %513 = vst.msk [vmem:[%s7 + $0x50] sm:$0xff] %vm53, %v475
    %514 = vst.msk [vmem:[%s7 + $0x58] sm:$0xff] %vm53, %v480
    %515 = vst.msk [vmem:[%s7 + $0x60] sm:$0xff] %vm53, %v485
    %516 = vst.msk [vmem:[%s7 + $0x68] sm:$0xff] %vm53, %v490
    %517 = vst.msk [vmem:[%s7 + $0x70] sm:$0xff] %vm53, %v495
    %518 = vst.msk [vmem:[%s7 + $0x78] sm:$0xff] %vm53, %v500
    // Predicated region
    $region26: #{tpu_custom_call.1} parent=1 // pred_check
      _
    $region27: #{tpu_custom_call.1} parent=1 // pred_check_branch
      %520 = sbr.rel (0) target = $region29
    $region28: #{tpu_custom_call.1} parent=1 // pred_region
      %s522 = ssub.s32 512, 512
      %523 = vsyncadd [#allocation3], %s522
      %s524 = sshll.u32 [#allocation2], 4
      %s525 = int_to_ptr.vmem [resolvable:$true] %s524
      %530 = dma.vmem_to_hbm [thread:$0]  %s525, 512, %s6, [#allocation3], 128, 128, 8
    $region29: #{tpu_custom_call.1} parent=1 // pred_fallthru
      _
    // Predicated region
    $region30: #{tpu_custom_call.1} parent=1 // pred_check
      _
    $region31: #{tpu_custom_call.1} parent=1 // pred_check_branch
      %532 = sbr.rel (0) target = $region33
    $region32: #{tpu_custom_call.1} parent=1 // pred_region
      _
    $region33: #{tpu_custom_call.1} parent=1 // pred_fallthru
      _
    // Predicated region
    $region34: #{tpu_custom_call.1} parent=1 // pred_check
      _
    $region35: #{tpu_custom_call.1} parent=1 // pred_check_branch
      %534 = sbr.rel (0) target = $region37
    $region36: #{tpu_custom_call.1} parent=1 // pred_region
      %535 = dma.done [#allocation3], 512
    $region37: #{tpu_custom_call.1} parent=1 // pred_fallthru
      _
    // Predicated region
    $region38: #{tpu_custom_call.1} parent=1 // pred_check
      _
    $region39: #{tpu_custom_call.1} parent=1 // pred_check_branch
      %537 = sbr.rel (0) target = $region41
    $region40: #{tpu_custom_call.1} parent=1 // pred_region
      _
    $region41: #{tpu_custom_call.1} parent=1 // pred_fallthru
      _
    %538 = vsyncpa [#allocation3], 1

</llo_original>
